<compile_context>
chip_gen: v5e
topology: v5e:2x2
jax: 0.10.0
libtpu: 0.0.40
codegen_flags: <defaults>
</compile_context>

<pallas_src>
import jax
import jax.numpy as jnp
from jax.experimental import pallas as pl
from jax.experimental.pallas import tpu as pltpu

HIDDEN = 256
MAX_BATCH_TILE = 1024  # big enough to amortize per-step overhead, small enough
                       # for v7x's scoped-VMEM default and >=2 tiles at large B


def _round_up(x, m):
    return ((x + m - 1) // m) * m


def critic_kernel(s_ref, a_ref,
                  w1_ref, b1_ref,
                  w2a_ref, w2b_ref, b2_ref,
                  w3_ref, b3_ref,
                  w4_ref, b4_ref,
                  o_ref):
    # f32 -> bf16 cast on the VPU (cheap; avoids extra XLA passes over HBM).
    s = s_ref[...].astype(jnp.bfloat16)          # (TB, S)
    a = a_ref[...].astype(jnp.bfloat16)          # (TB, A)

    # fc1: MXU bf16, f32 accumulate; ReLU in f32; downcast only for next dot.
    x1 = jnp.dot(s, w1_ref[...], preferred_element_type=jnp.float32) + b1_ref[...]
    h1 = jnp.maximum(x1, 0.0).astype(jnp.bfloat16)

    # fc2 on cat([relu(x1), action]) == relu(x1) @ W2a + action @ W2b + b2
    # (mathematically identical; avoids in-kernel concatenation).
    x2 = (jnp.dot(h1, w2a_ref[...], preferred_element_type=jnp.float32)
          + jnp.dot(a, w2b_ref[...], preferred_element_type=jnp.float32)
          + b2_ref[...])
    h2 = jnp.maximum(x2, 0.0).astype(jnp.bfloat16)

    # fc3 + ReLU + fc4 fused.  fc4 has N=1, so instead of wasting 255/256 MXU
    # columns it is a broadcast-multiply + lane reduction; kept as one
    # expression so no extra f32 temp is staged to VMEM (v5e has 1 vst slot).
    x3 = jnp.dot(h2, w3_ref[...], preferred_element_type=jnp.float32) + b3_ref[...]
    o_ref[...] = (jnp.sum(jnp.maximum(x3, 0.0) * w4_ref[...],
                          axis=-1, keepdims=True)
                  + b4_ref[0])                   # b4 is an SMEM scalar


def critic_forward(state, action, params):
    """state: (B, state_size) f32, action: (B, action_size) f32 -> (B, 1) f32."""
    B, S = state.shape
    A = action.shape[1]
    (w1t, b1, w2a_t, w2b_t, b2, w3t, b3, w4_row, b4) = params

    # Balanced batch tiles: cap at MAX_BATCH_TILE, split evenly so the last
    # tile is not mostly waste, round to a multiple of 16 (bf16 vreg packing).
    n_tiles = max(1, pl.cdiv(B, MAX_BATCH_TILE))
    TB = _round_up(pl.cdiv(B, n_tiles), 16)
    grid = (pl.cdiv(B, TB),)   # Pallas masks the partial last block (row-wise net)

    const = lambda i: (0, 0)   # weights/biases: DMA once, stay VMEM-resident
    in_specs = [
        pl.BlockSpec((TB, S), lambda i: (i, 0)),        # state tile (f32)
        pl.BlockSpec((TB, A), lambda i: (i, 0)),        # action tile (f32)
        pl.BlockSpec((S, HIDDEN), const),               # W1^T (bf16)
        pl.BlockSpec((1, HIDDEN), const),               # b1
        pl.BlockSpec((HIDDEN, HIDDEN), const),          # W2a^T (bf16)
        pl.BlockSpec((A, HIDDEN), const),               # W2b^T (bf16)
        pl.BlockSpec((1, HIDDEN), const),               # b2
        pl.BlockSpec((HIDDEN, HIDDEN), const),          # W3^T (bf16)
        pl.BlockSpec((1, HIDDEN), const),               # b3
        pl.BlockSpec((1, HIDDEN), const),               # W4 row (f32)
        pl.BlockSpec(memory_space=pltpu.MemorySpace.SMEM),  # b4 scalar
    ]
    out_spec = pl.BlockSpec((TB, 1), lambda i: (i, 0))

    flops = 2 * B * (S * HIDDEN + HIDDEN * HIDDEN + A * HIDDEN
                     + HIDDEN * HIDDEN + HIDDEN)
    weight_bytes = (2 * (S * HIDDEN + HIDDEN * HIDDEN + A * HIDDEN + HIDDEN * HIDDEN)
                    + 4 * (3 * HIDDEN + HIDDEN + 1))
    bytes_accessed = B * (S + A) * 4 + B * 4 + weight_bytes

    out = pl.pallas_call(
        critic_kernel,
        out_shape=jax.ShapeDtypeStruct((B, 1), jnp.float32),
        grid=grid,
        in_specs=in_specs,
        out_specs=out_spec,
        compiler_params=pltpu.CompilerParams(
            dimension_semantics=("parallel",)),
        cost_estimate=pl.CostEstimate(
            flops=flops, transcendentals=0, bytes_accessed=bytes_accessed),
    )(state, action, w1t, b1, w2a_t, w2b_t, b2, w3t, b3, w4_row, b4)

    return out


def init_params(key, state_size, action_size):
    """Deterministic init mirroring Critic.reset_parameters shapes/ranges.

    NOTE: the original hidden_init uses weight.size()[0] (= out_features) as
    "fan_in"; we reproduce that quirk, as well as fc4.weight ~ U(-1e-20, 1e-20)
    and the default (untouched-by-reset) PyTorch bias init U(+-1/sqrt(in)).
    Weights that feed the MXU are stored in bf16 so no per-call casts happen.
    """
    ks = jax.random.split(key, 8)

    def uni(k, shape, lim):
        return jax.random.uniform(k, shape, jnp.float32, -lim, lim)

    lim_h = 1.0 / jnp.sqrt(jnp.float32(HIDDEN))

    # PyTorch Linear weights are (out, in); we store transposed (in, out).
    w1t = uni(ks[0], (state_size, HIDDEN), lim_h).astype(jnp.bfloat16)
    b1 = uni(ks[1], (1, HIDDEN), 1.0 / jnp.sqrt(jnp.float32(state_size)))

    w2t_full = uni(ks[2], (HIDDEN + action_size, HIDDEN), lim_h)
    w2a_t = w2t_full[:HIDDEN, :].astype(jnp.bfloat16)   # multiplies relu(fc1(state))
    w2b_t = w2t_full[HIDDEN:, :].astype(jnp.bfloat16)   # multiplies action
    b2 = uni(ks[3], (1, HIDDEN), 1.0 / jnp.sqrt(jnp.float32(HIDDEN + action_size)))

    w3t = uni(ks[4], (HIDDEN, HIDDEN), lim_h).astype(jnp.bfloat16)
    b3 = uni(ks[5], (1, HIDDEN), 1.0 / jnp.sqrt(jnp.float32(HIDDEN)))

    # fc4.weight ~ U(-1e-20, 1e-20) per the original module; lane-dense (1, 256)
    # row, kept f32 since it is used on the VPU (no MXU).
    w4_row = uni(ks[6], (1, HIDDEN), 1e-20)
    b4 = uni(ks[7], (1,), 1.0 / jnp.sqrt(jnp.float32(HIDDEN)))   # SMEM scalar

    return (w1t, b1, w2a_t, w2b_t, b2, w3t, b3, w4_row, b4)


def critic_ref(state, action, params):
    """Pure-JAX f32 reference for verification (same bf16 weight values)."""
    (w1t, b1, w2a_t, w2b_t, b2, w3t, b3, w4_row, b4) = params
    w1t, w2a_t, w2b_t, w3t = (w.astype(jnp.float32) for w in (w1t, w2a_t, w2b_t, w3t))
    x = state @ w1t + b1
    h = jnp.maximum(x, 0.0)
    x = h @ w2a_t + action @ w2b_t + b2
    h = jnp.maximum(x, 0.0)
    x = h @ w3t + b3
    h = jnp.maximum(x, 0.0)
    return h @ w4_row.T + b4


if __name__ == "__main__":
    key = jax.random.PRNGKey(0)
    k_p, k_s, k_a, k_w4 = jax.random.split(key, 4)

    batch = 32
    state_size = 16
    action_size = 4

    params = init_params(k_p, state_size, action_size)
    state = jax.random.normal(k_s, (batch, state_size), jnp.float32)
    action = jax.random.normal(k_a, (batch, action_size), jnp.float32)

    # 1) Module-faithful params (fc4 weight ~ 1e-20, so output ~= b4).
    out = jax.block_until_ready(critic_forward(state, action, params))
    ref = critic_ref(state, action, params)
    assert out.shape == (batch, 1)
    assert jnp.allclose(out, ref, atol=2e-2, rtol=2e-2), (
        float(jnp.max(jnp.abs(out - ref))))

    # 2) Same kernel with a non-degenerate fc4 weight so the full math path
    #    (fc1..fc4) is actually exercised numerically.
    w4_test = jax.random.uniform(k_w4, (1, HIDDEN), jnp.float32, -0.0625, 0.0625)
    params_test = params[:7] + (w4_test, params[8])
    out_t = jax.block_until_ready(critic_forward(state, action, params_test))
    ref_t = critic_ref(state, action, params_test)
    assert jnp.allclose(out_t, ref_t, atol=2e-2, rtol=2e-2), (
        float(jnp.max(jnp.abs(out_t - ref_t))))

    print("KERNEL_OK")
</pallas_src>

<mosaic_0001>
module attributes {stable_mosaic.version = 11 : i64} {
  func.func @critic_kernel(%arg0: i32, %arg1: memref<32x16xf32, #tpu.memory_space<vmem>>, %arg2: memref<32x4xf32, #tpu.memory_space<vmem>>, %arg3: memref<16x256xbf16, #tpu.memory_space<vmem>>, %arg4: memref<1x256xf32, #tpu.memory_space<vmem>>, %arg5: memref<256x256xbf16, #tpu.memory_space<vmem>>, %arg6: memref<4x256xbf16, #tpu.memory_space<vmem>>, %arg7: memref<1x256xf32, #tpu.memory_space<vmem>>, %arg8: memref<256x256xbf16, #tpu.memory_space<vmem>>, %arg9: memref<1x256xf32, #tpu.memory_space<vmem>>, %arg10: memref<1x256xf32, #tpu.memory_space<vmem>>, %arg11: memref<1xf32, #tpu.memory_space<smem>>, %arg12: memref<32x1xf32, #tpu.memory_space<vmem>>) attributes {dimension_semantics = [#tpu.dimension_semantics<parallel>], iteration_bounds = array<i64: 1>, scalar_prefetch = 0 : i64, scratch_operands = 0 : i64, tpu.core_type = #tpu.core_type<tc>, window_params = [{transform_indices = @transform_0, window_bounds = array<i64: 32, 16>}, {transform_indices = @transform_1, window_bounds = array<i64: 32, 4>}, {pipeline_mode = #tpu.pipeline_mode<synchronous>, transform_indices = @transform_2, window_bounds = array<i64: 16, 256>}, {pipeline_mode = #tpu.pipeline_mode<synchronous>, transform_indices = @transform_3, window_bounds = array<i64: 1, 256>}, {pipeline_mode = #tpu.pipeline_mode<synchronous>, transform_indices = @transform_4, window_bounds = array<i64: 256, 256>}, {pipeline_mode = #tpu.pipeline_mode<synchronous>, transform_indices = @transform_5, window_bounds = array<i64: 4, 256>}, {pipeline_mode = #tpu.pipeline_mode<synchronous>, transform_indices = @transform_6, window_bounds = array<i64: 1, 256>}, {pipeline_mode = #tpu.pipeline_mode<synchronous>, transform_indices = @transform_7, window_bounds = array<i64: 256, 256>}, {pipeline_mode = #tpu.pipeline_mode<synchronous>, transform_indices = @transform_8, window_bounds = array<i64: 1, 256>}, {pipeline_mode = #tpu.pipeline_mode<synchronous>, transform_indices = @transform_9, window_bounds = array<i64: 1, 256>}, {transform_indices = @transform_10, window_bounds = array<i64: 1>}, {transform_indices = @transform_11, window_bounds = array<i64: 32, 1>}]} {
    %c0 = arith.constant 0 : index
    %c0_0 = arith.constant 0 : index
    %0 = vector.load %arg1[%c0, %c0_0] : memref<32x16xf32, #tpu.memory_space<vmem>>, vector<32x16xf32>
    %1 = arith.truncf %0 : vector<32x16xf32> to vector<32x16xbf16>
    %c0_1 = arith.constant 0 : index
    %c0_2 = arith.constant 0 : index
    %2 = vector.load %arg2[%c0_1, %c0_2] : memref<32x4xf32, #tpu.memory_space<vmem>>, vector<32x4xf32>
    %3 = arith.truncf %2 : vector<32x4xf32> to vector<32x4xbf16>
    %c0_3 = arith.constant 0 : index
    %c0_4 = arith.constant 0 : index
    %4 = vector.load %arg3[%c0_3, %c0_4] : memref<16x256xbf16, #tpu.memory_space<vmem>>, vector<16x256xbf16>
    %cst = arith.constant dense<0.000000e+00> : vector<32x256xf32>
    %5 = tpu.matmul %1, %4, %cst {dimension_numbers = #tpu.dot_dimension_numbers<[1], [0], [0], [1], [0, 0, 1, 1], [], []>} : vector<32x16xbf16>, vector<16x256xbf16>, vector<32x256xf32> -> vector<32x256xf32>
    %c0_5 = arith.constant 0 : index
    %c0_6 = arith.constant 0 : index
    %6 = vector.load %arg4[%c0_5, %c0_6] : memref<1x256xf32, #tpu.memory_space<vmem>>, vector<1x256xf32>
    %7 = vector.broadcast %6 : vector<1x256xf32> to vector<32x256xf32>
    %8 = arith.addf %5, %7 : vector<32x256xf32>
    %cst_7 = arith.constant 0.000000e+00 : f32
    %9 = vector.broadcast %cst_7 : f32 to vector<32x256xf32>
    %10 = arith.maximumf %8, %9 : vector<32x256xf32>
    %11 = arith.truncf %10 : vector<32x256xf32> to vector<32x256xbf16>
    %c0_8 = arith.constant 0 : index
    %c0_9 = arith.constant 0 : index
    %12 = vector.load %arg5[%c0_8, %c0_9] : memref<256x256xbf16, #tpu.memory_space<vmem>>, vector<256x256xbf16>
    %cst_10 = arith.constant dense<0.000000e+00> : vector<32x256xf32>
    %13 = tpu.matmul %11, %12, %cst_10 {dimension_numbers = #tpu.dot_dimension_numbers<[1], [0], [0], [1], [0, 0, 1, 1], [], []>} : vector<32x256xbf16>, vector<256x256xbf16>, vector<32x256xf32> -> vector<32x256xf32>
    %c0_11 = arith.constant 0 : index
    %c0_12 = arith.constant 0 : index
    %14 = vector.load %arg6[%c0_11, %c0_12] : memref<4x256xbf16, #tpu.memory_space<vmem>>, vector<4x256xbf16>
    %cst_13 = arith.constant dense<0.000000e+00> : vector<32x256xf32>
    %15 = tpu.matmul %3, %14, %cst_13 {dimension_numbers = #tpu.dot_dimension_numbers<[1], [0], [0], [1], [0, 0, 1, 1], [], []>} : vector<32x4xbf16>, vector<4x256xbf16>, vector<32x256xf32> -> vector<32x256xf32>
    %16 = arith.addf %13, %15 : vector<32x256xf32>
    %c0_14 = arith.constant 0 : index
    %c0_15 = arith.constant 0 : index
    %17 = vector.load %arg7[%c0_14, %c0_15] : memref<1x256xf32, #tpu.memory_space<vmem>>, vector<1x256xf32>
    %18 = vector.broadcast %17 : vector<1x256xf32> to vector<32x256xf32>
    %19 = arith.addf %16, %18 : vector<32x256xf32>
    %cst_16 = arith.constant 0.000000e+00 : f32
    %20 = vector.broadcast %cst_16 : f32 to vector<32x256xf32>
    %21 = arith.maximumf %19, %20 : vector<32x256xf32>
    %22 = arith.truncf %21 : vector<32x256xf32> to vector<32x256xbf16>
    %c0_17 = arith.constant 0 : index
    %c0_18 = arith.constant 0 : index
    %23 = vector.load %arg8[%c0_17, %c0_18] : memref<256x256xbf16, #tpu.memory_space<vmem>>, vector<256x256xbf16>
    %cst_19 = arith.constant dense<0.000000e+00> : vector<32x256xf32>
    %24 = tpu.matmul %22, %23, %cst_19 {dimension_numbers = #tpu.dot_dimension_numbers<[1], [0], [0], [1], [0, 0, 1, 1], [], []>} : vector<32x256xbf16>, vector<256x256xbf16>, vector<32x256xf32> -> vector<32x256xf32>
    %c0_20 = arith.constant 0 : index
    %c0_21 = arith.constant 0 : index
    %25 = vector.load %arg9[%c0_20, %c0_21] : memref<1x256xf32, #tpu.memory_space<vmem>>, vector<1x256xf32>
    %26 = vector.broadcast %25 : vector<1x256xf32> to vector<32x256xf32>
    %27 = arith.addf %24, %26 : vector<32x256xf32>
    %cst_22 = arith.constant 0.000000e+00 : f32
    %28 = vector.broadcast %cst_22 : f32 to vector<32x256xf32>
    %29 = arith.maximumf %27, %28 : vector<32x256xf32>
    %c0_23 = arith.constant 0 : index
    %c0_24 = arith.constant 0 : index
    %30 = vector.load %arg10[%c0_23, %c0_24] : memref<1x256xf32, #tpu.memory_space<vmem>>, vector<1x256xf32>
    %31 = vector.broadcast %30 : vector<1x256xf32> to vector<32x256xf32>
    %32 = arith.mulf %29, %31 : vector<32x256xf32>
    %cst_25 = arith.constant dense<0.000000e+00> : vector<32xf32>
    %33 = vector.multi_reduction <add>, %32, %cst_25 [1] : vector<32x256xf32> to vector<32xf32>
    %34 = vector.shape_cast %33 : vector<32xf32> to vector<32x1xf32>
    %c0_26 = arith.constant 0 : index
    %35 = memref.load %arg11[%c0_26] : memref<1xf32, #tpu.memory_space<smem>>
    %36 = vector.broadcast %35 : f32 to vector<32x1xf32>
    %37 = arith.addf %34, %36 : vector<32x1xf32>
    %c0_27 = arith.constant 0 : index
    %c0_28 = arith.constant 0 : index
    %38 = vector.load %arg12[%c0_27, %c0_28] : memref<32x1xf32, #tpu.memory_space<vmem>>, vector<32x1xf32>
    tpu.vector_store %arg12[%c0_27, %c0_28], %37 {strides = array<i32>} : memref<32x1xf32, #tpu.memory_space<vmem>>, vector<32x1xf32>,
    return
  }
  func.func @transform_0(%arg0: i32) -> (i32, i32) {
    %c0_i32 = arith.constant 0 : i32
    %c0_i32_0 = arith.constant 0 : i32
    return %arg0, %c0_i32 : i32, i32
  }
  func.func @transform_1(%arg0: i32) -> (i32, i32) {
    %c0_i32 = arith.constant 0 : i32
    %c0_i32_0 = arith.constant 0 : i32
    return %arg0, %c0_i32 : i32, i32
  }
  func.func @transform_2(%arg0: i32) -> (i32, i32) {
    %c0_i32 = arith.constant 0 : i32
    %c0_i32_0 = arith.constant 0 : i32
    %c0_i32_1 = arith.constant 0 : i32
    return %c0_i32, %c0_i32_0 : i32, i32
  }
  func.func @transform_3(%arg0: i32) -> (i32, i32) {
    %c0_i32 = arith.constant 0 : i32
    %c0_i32_0 = arith.constant 0 : i32
    %c0_i32_1 = arith.constant 0 : i32
    return %c0_i32, %c0_i32_0 : i32, i32
  }
  func.func @transform_4(%arg0: i32) -> (i32, i32) {
    %c0_i32 = arith.constant 0 : i32
    %c0_i32_0 = arith.constant 0 : i32
    %c0_i32_1 = arith.constant 0 : i32
    return %c0_i32, %c0_i32_0 : i32, i32
  }
  func.func @transform_5(%arg0: i32) -> (i32, i32) {
    %c0_i32 = arith.constant 0 : i32
    %c0_i32_0 = arith.constant 0 : i32
    %c0_i32_1 = arith.constant 0 : i32
    return %c0_i32, %c0_i32_0 : i32, i32
  }
  func.func @transform_6(%arg0: i32) -> (i32, i32) {
    %c0_i32 = arith.constant 0 : i32
    %c0_i32_0 = arith.constant 0 : i32
    %c0_i32_1 = arith.constant 0 : i32
    return %c0_i32, %c0_i32_0 : i32, i32
  }
  func.func @transform_7(%arg0: i32) -> (i32, i32) {
    %c0_i32 = arith.constant 0 : i32
    %c0_i32_0 = arith.constant 0 : i32
    %c0_i32_1 = arith.constant 0 : i32
    return %c0_i32, %c0_i32_0 : i32, i32
  }
  func.func @transform_8(%arg0: i32) -> (i32, i32) {
    %c0_i32 = arith.constant 0 : i32
    %c0_i32_0 = arith.constant 0 : i32
    %c0_i32_1 = arith.constant 0 : i32
    return %c0_i32, %c0_i32_0 : i32, i32
  }
  func.func @transform_9(%arg0: i32) -> (i32, i32) {
    %c0_i32 = arith.constant 0 : i32
    %c0_i32_0 = arith.constant 0 : i32
    %c0_i32_1 = arith.constant 0 : i32
    return %c0_i32, %c0_i32_0 : i32, i32
  }
  func.func @transform_10(%arg0: i32) -> i32 {
    %c0_i32 = arith.constant 0 : i32
    %c0_i32_0 = arith.constant 0 : i32
    return %c0_i32 : i32
  }
  func.func @transform_11(%arg0: i32) -> (i32, i32) {
    %c0_i32 = arith.constant 0 : i32
    %c0_i32_0 = arith.constant 0 : i32
    return %arg0, %c0_i32 : i32, i32
  }
}

</mosaic_0001>

<llo_original>
// kernel: tpu_custom_call.1
$region0: #{tpu_custom_call.1}
  #allocation0 [shape = 'u32[]', space=smem, size = 0x4, offset = 0x4, fixed_abs, tag = 'smem constant byte address 0x4 - core index']
  #allocation1 [shape = 'u32[72,128]{1,0:T(1,128)}', space=vmem, size = 0x9000, scoped, tag = 'internal scratch']
  #allocation2 [shape = 'f32[1]{0:T(128)S(6)}', space=smem, size = 0x200, scoped, tag = 'scoped memory for tpu_custom_call.1']
  %s0 = inlined_call_operand.vmem [shape: f32[32,16], index: 0, kind: input, shape index: {}]
  %s1 = inlined_call_operand.vmem [shape: f32[32,4], index: 1, kind: input, shape index: {}]
  %s2 = inlined_call_operand.vmem [shape: bf16[16,256], index: 2, kind: input, shape index: {}]
  %s3 = inlined_call_operand.vmem [shape: f32[1,256], index: 3, kind: input, shape index: {}]
  %s4 = inlined_call_operand.hbm [shape: bf16[256,256], index: 4, kind: input, shape index: {}]
  %s5 = inlined_call_operand.vmem [shape: bf16[4,256], index: 5, kind: input, shape index: {}]
  %s6 = inlined_call_operand.vmem [shape: f32[1,256], index: 6, kind: input, shape index: {}]
  %s7 = inlined_call_operand.hbm [shape: bf16[256,256], index: 7, kind: input, shape index: {}]
  %s8 = inlined_call_operand.vmem [shape: f32[1,256], index: 8, kind: input, shape index: {}]
  %s9 = inlined_call_operand.vmem [shape: f32[1,256], index: 9, kind: input, shape index: {}]
  %s10 = inlined_call_operand.<no memory space> [shape: f32[1], index: 10, kind: input, shape index: {}]
  %s11 = inlined_call_operand.vmem [shape: f32[32,1], index: 11, kind: output, shape index: {}]
  %s12 = sld [smem:[#allocation0]]
  $region62: #{tpu_custom_call.1} parent=0
    _
  %s14 = ssub.s32 1, %s12
  %s15 = scalar_select 0, %s14, %s12
  %16 = sst [smem:[#allocation2]] %s10
  $region1: #{tpu_custom_call.1} parent=0
    #allocation3 [shape = 'u8[131072]{0}', space=vmem, size = 0x20000, scoped, tag = 'input window, operand 4, single buffered']
    #allocation4 [shape = 's32[1]{0}', space=sflag, size = 0x4, scoped, tag = 'scoped memory for tpu_custom_call.1']
    #allocation5 [shape = 'u8[131072]{0}', space=vmem, size = 0x20000, scoped, tag = 'input window, operand 7, single buffered']
    #allocation6 [shape = 's32[1]{0}', space=sflag, size = 0x4, scoped, tag = 'scoped memory for tpu_custom_call.1']
    %17 = vsyncpa [#allocation4], 0
    %18 = vsyncpa [#allocation6], 0
    // Predicated region
    $region2: #{tpu_custom_call.1} parent=1 // pred_check
      _
    $region3: #{tpu_custom_call.1} parent=1 // pred_check_branch
      %20 = sbr.rel (0) target = $region5
    $region4: #{tpu_custom_call.1} parent=1 // pred_region
      _
    $region5: #{tpu_custom_call.1} parent=1 // pred_fallthru
      _
    // Predicated region
    $region6: #{tpu_custom_call.1} parent=1 // pred_check
      _
    $region7: #{tpu_custom_call.1} parent=1 // pred_check_branch
      %22 = sbr.rel (0) target = $region9
    $region8: #{tpu_custom_call.1} parent=1 // pred_region
      _
    $region9: #{tpu_custom_call.1} parent=1 // pred_fallthru
      _
    // Predicated region
    $region10: #{tpu_custom_call.1} parent=1 // pred_check
      _
    $region11: #{tpu_custom_call.1} parent=1 // pred_check_branch
      %24 = sbr.rel (0) target = $region13
    $region12: #{tpu_custom_call.1} parent=1 // pred_region
      _
    $region13: #{tpu_custom_call.1} parent=1 // pred_fallthru
      _
    // Predicated region
    $region14: #{tpu_custom_call.1} parent=1 // pred_check
      _
    $region15: #{tpu_custom_call.1} parent=1 // pred_check_branch
      %26 = sbr.rel (0) target = $region17
    $region16: #{tpu_custom_call.1} parent=1 // pred_region
      _
    $region17: #{tpu_custom_call.1} parent=1 // pred_fallthru
      _
    // Predicated region
    $region18: #{tpu_custom_call.1} parent=1 // pred_check
      _
    $region19: #{tpu_custom_call.1} parent=1 // pred_check_branch
      %28 = sbr.rel (0) target = $region21
    $region20: #{tpu_custom_call.1} parent=1 // pred_region
      %30 = vsyncadd [#allocation4], 0
      %s31 = sshll.u32 %s4, 4
      %s32 = int_to_ptr.hbm [resolvable:$true] %s31
      %s33 = sshll.u32 [#allocation3], 4
      %s34 = int_to_ptr.vmem [resolvable:$true] %s33
      %39 = dma.hbm_to_vmem [thread:$0]  %s32, 4096, %s34, [#allocation4], 128, 128, 8
    $region21: #{tpu_custom_call.1} parent=1 // pred_fallthru
      _
    // Predicated region
    $region22: #{tpu_custom_call.1} parent=1 // pred_check
      _
    $region23: #{tpu_custom_call.1} parent=1 // pred_check_branch
      %41 = sbr.rel (0) target = $region25
    $region24: #{tpu_custom_call.1} parent=1 // pred_region
      _
    $region25: #{tpu_custom_call.1} parent=1 // pred_fallthru
      _
    // Predicated region
    $region26: #{tpu_custom_call.1} parent=1 // pred_check
      _
    $region27: #{tpu_custom_call.1} parent=1 // pred_check_branch
      %43 = sbr.rel (0) target = $region29
    $region28: #{tpu_custom_call.1} parent=1 // pred_region
      _
    $region29: #{tpu_custom_call.1} parent=1 // pred_fallthru
      _
    // Predicated region
    $region30: #{tpu_custom_call.1} parent=1 // pred_check
      _
    $region31: #{tpu_custom_call.1} parent=1 // pred_check_branch
      %45 = sbr.rel (0) target = $region33
    $region32: #{tpu_custom_call.1} parent=1 // pred_region
      %47 = vsyncadd [#allocation6], 0
      %s48 = sshll.u32 %s7, 4
      %s49 = int_to_ptr.hbm [resolvable:$true] %s48
      %s50 = sshll.u32 [#allocation5], 4
      %s51 = int_to_ptr.vmem [resolvable:$true] %s50
      %56 = dma.hbm_to_vmem [thread:$0]  %s49, 4096, %s51, [#allocation6], 128, 128, 8
    $region33: #{tpu_custom_call.1} parent=1 // pred_fallthru
      _
    // Predicated region
    $region34: #{tpu_custom_call.1} parent=1 // pred_check
      _
    $region35: #{tpu_custom_call.1} parent=1 // pred_check_branch
      %58 = sbr.rel (0) target = $region37
    $region36: #{tpu_custom_call.1} parent=1 // pred_region
      _
    $region37: #{tpu_custom_call.1} parent=1 // pred_fallthru
      _
    // Predicated region
    $region38: #{tpu_custom_call.1} parent=1 // pred_check
      _
    $region39: #{tpu_custom_call.1} parent=1 // pred_check_branch
      %60 = sbr.rel (0) target = $region41
    $region40: #{tpu_custom_call.1} parent=1 // pred_region
      _
    $region41: #{tpu_custom_call.1} parent=1 // pred_fallthru
      _
    // Predicated region
    $region42: #{tpu_custom_call.1} parent=1 // pred_check
      _
    $region43: #{tpu_custom_call.1} parent=1 // pred_check_branch
      %62 = sbr.rel (0) target = $region45
    $region44: #{tpu_custom_call.1} parent=1 // pred_region
      _
    $region45: #{tpu_custom_call.1} parent=1 // pred_fallthru
      _
    // Predicated region
    $region46: #{tpu_custom_call.1} parent=1 // pred_check
      _
    $region47: #{tpu_custom_call.1} parent=1 // pred_check_branch
      %64 = sbr.rel (0) target = $region49
    $region48: #{tpu_custom_call.1} parent=1 // pred_region
      %66 = dma.done [#allocation4], 4096
    $region49: #{tpu_custom_call.1} parent=1 // pred_fallthru
      _
    // Predicated region
    $region50: #{tpu_custom_call.1} parent=1 // pred_check
      _
    $region51: #{tpu_custom_call.1} parent=1 // pred_check_branch
      %68 = sbr.rel (0) target = $region53
    $region52: #{tpu_custom_call.1} parent=1 // pred_region
      %70 = dma.done [#allocation6], 4096
    $region53: #{tpu_custom_call.1} parent=1 // pred_fallthru
      _
    %v72 = vld [vmem:[%s0] sm:$0xff]
    %v73 = vld [vmem:[%s0 + $0x8] sm:$0xff]
    %v74 = vld [vmem:[%s0 + $0x10] sm:$0xff]
    %v75 = vld [vmem:[%s0 + $0x18] sm:$0xff]
    %v76 = vpack.c.bf16 %v73, %v72
    %v77 = vpack.c.bf16 %v75, %v74
    %v78 = vld [vmem:[%s1] sm:$0xff]
    %v79 = vld [vmem:[%s1 + $0x8] sm:$0xff]
    %v80 = vld [vmem:[%s1 + $0x10] sm:$0xff]
    %v81 = vld [vmem:[%s1 + $0x18] sm:$0xff]
    %v82 = vpack.c.bf16 %v79, %v78
    %v83 = vpack.c.bf16 %v81, %v80
    %v84 = vld [vmem:[%s2] sm:$0xff]
    %v85 = vld [vmem:[%s2 + $0x8] sm:$0xff]
    %v86 = vld [vmem:[%s3] sm:$0x3]
    %v88 = vperm.slane %v86, 0
    %v89 = vperm.slane %v86, 1
    %v94 = vunpack.c.l.b16 %v84
    %v95 = vunpack.c.h.b16 %v84
    %v96 = vunpack.c.l.b16 %v85
    %v97 = vunpack.c.h.b16 %v85
    %v98 = vpack.c.b16 %v96, %v94
    %v99 = vpack.c.b16 %v97, %v95
    %vm102 = vcmask 130048
    %v104 = vsel %vm102, %v76, 0
    %v107 = vsel %vm102, %v77, 0
    %109 = vmatpush.bf16.msra.mxu0 0
    %110 = vmatpush.bf16.msra.mxu0 0
    %111 = vmatpush.bf16.msra.mxu0 0
    %112 = vmatpush.bf16.msra.mxu0 0
    %113 = vmatpush.bf16.msra.mxu0 0
    %114 = vmatpush.bf16.msra.mxu0 0
    %115 = vmatpush.bf16.msra.mxu0 0
    %116 = vmatpush.bf16.msra.mxu0 %v98
    %117 = vmatmul.bf16.gmra.mxu0 %v104
    %v118 = vpop.f32.mrf.mxu0
    %v119 = vadd.f32 %v88, %v118
    %v120 = vpop.f32.mrf.mxu0
    %v121 = vadd.f32 %v88, %v120
    %122 = vmatmul.bf16.gmra.mxu0 %v107
    %v123 = vpop.f32.mrf.mxu0
    %v124 = vadd.f32 %v88, %v123
    %v125 = vpop.f32.mrf.mxu0
    %v126 = vadd.f32 %v88, %v125
    %127 = vdwg.mxu0
    %128 = vmatpush.bf16.msra.mxu0 0
    %129 = vmatpush.bf16.msra.mxu0 0
    %130 = vmatpush.bf16.msra.mxu0 0
    %131 = vmatpush.bf16.msra.mxu0 0
    %132 = vmatpush.bf16.msra.mxu0 0
    %133 = vmatpush.bf16.msra.mxu0 0
    %134 = vmatpush.bf16.msra.mxu0 0
    %135 = vmatpush.bf16.msra.mxu0 %v99
    %136 = vmatmul.bf16.gmra.mxu0 %v104
    %v137 = vpop.f32.mrf.mxu0
    %v138 = vadd.f32 %v89, %v137
    %v139 = vpop.f32.mrf.mxu0
    %v140 = vadd.f32 %v89, %v139
    %141 = vmatmul.bf16.gmra.mxu0 %v107
    %v142 = vpop.f32.mrf.mxu0
    %v143 = vadd.f32 %v89, %v142
    %v144 = vpop.f32.mrf.mxu0
    %v145 = vadd.f32 %v89, %v144
    %146 = vdwg.mxu0
    %v147 = vmax.f32 %v119, 0.0
    %v148 = vmax.f32 %v138, 0.0
    %v149 = vmax.f32 %v121, 0.0
    %v150 = vmax.f32 %v140, 0.0
    %v151 = vmax.f32 %v124, 0.0
    %v152 = vmax.f32 %v143, 0.0
    %v153 = vmax.f32 %v126, 0.0
    %v154 = vmax.f32 %v145, 0.0
    %v155 = vpack.c.bf16 %v149, %v147
    %v156 = vpack.c.bf16 %v150, %v148
    %v157 = vpack.c.bf16 %v153, %v151
    %v158 = vpack.c.bf16 %v154, %v152
    %v159 = vld [vmem:[#allocation3] sm:$0xff]
    %v160 = vld [vmem:[#allocation3 + $0x8] sm:$0xff]
    %v161 = vld [vmem:[#allocation3 + $0x10] sm:$0xff]
    %v162 = vld [vmem:[#allocation3 + $0x18] sm:$0xff]
    %v163 = vld [vmem:[#allocation3 + $0x20] sm:$0xff]
    %v164 = vld [vmem:[#allocation3 + $0x28] sm:$0xff]
    %v165 = vld [vmem:[#allocation3 + $0x30] sm:$0xff]
    %v166 = vld [vmem:[#allocation3 + $0x38] sm:$0xff]
    %v167 = vld [vmem:[#allocation3 + $0x40] sm:$0xff]
    %v168 = vld [vmem:[#allocation3 + $0x48] sm:$0xff]
    %v169 = vld [vmem:[#allocation3 + $0x50] sm:$0xff]
    %v170 = vld [vmem:[#allocation3 + $0x58] sm:$0xff]
    %v171 = vld [vmem:[#allocation3 + $0x60] sm:$0xff]
    %v172 = vld [vmem:[#allocation3 + $0x68] sm:$0xff]
    %v173 = vld [vmem:[#allocation3 + $0x70] sm:$0xff]
    %v174 = vld [vmem:[#allocation3 + $0x78] sm:$0xff]
    %v175 = vld [vmem:[#allocation3 + $0x80] sm:$0xff]
    %v176 = vld [vmem:[#allocation3 + $0x88] sm:$0xff]
    %v177 = vld [vmem:[#allocation3 + $0x90] sm:$0xff]
    %v178 = vld [vmem:[#allocation3 + $0x98] sm:$0xff]
    %v179 = vld [vmem:[#allocation3 + $0xa0] sm:$0xff]
    %v180 = vld [vmem:[#allocation3 + $0xa8] sm:$0xff]
    %v181 = vld [vmem:[#allocation3 + $0xb0] sm:$0xff]
    %v182 = vld [vmem:[#allocation3 + $0xb8] sm:$0xff]
    %v183 = vld [vmem:[#allocation3 + $0xc0] sm:$0xff]
    %v184 = vld [vmem:[#allocation3 + $0xc8] sm:$0xff]
    %v185 = vld [vmem:[#allocation3 + $0xd0] sm:$0xff]
    %v186 = vld [vmem:[#allocation3 + $0xd8] sm:$0xff]
    %v187 = vld [vmem:[#allocation3 + $0xe0] sm:$0xff]
    %v188 = vld [vmem:[#allocation3 + $0xe8] sm:$0xff]
    %v189 = vld [vmem:[#allocation3 + $0xf0] sm:$0xff]
    %v190 = vld [vmem:[#allocation3 + $0xf8] sm:$0xff]
    %v191 = vld [vmem:[%s5] sm:$0xf]
    %193 = vst [vmem:[#allocation1] ss:$4 sm:$0xff] %v191
    %v194 = vld.sshfl [vmem:[#allocation1] sm:$0xff pattern:$0x73625140]
    %v195 = vld.sshfl [vmem:[#allocation1 + $0x8] sm:$0xff pattern:$0x73625140]
    %vm196 = vcmask 31744
    %v198 = vsel %vm196, %v82, 0
    %v201 = vsel %vm196, %v83, 0
    %vm203 = vcmask 1041408
    %v204 = vsel %vm203, %v194, 0
    %v206 = vsel %vm203, %v195, 0
    %208 = vmatpush.bf16.msra.mxu0 0
    %209 = vmatpush.bf16.msra.mxu0 0
    %210 = vmatpush.bf16.msra.mxu0 0
    %211 = vmatpush.bf16.msra.mxu0 0
    %212 = vmatpush.bf16.msra.mxu0 0
    %213 = vmatpush.bf16.msra.mxu0 0
    %214 = vmatpush.bf16.msra.mxu0 0
    %215 = vmatpush.bf16.msra.mxu0 %v204
    %216 = vmatmul.bf16.gmra.mxu0 %v198
    %v217 = vpop.f32.mrf.mxu0
    %v218 = vadd.f32 0.0, %v217
    %v219 = vpop.f32.mrf.mxu0
    %v220 = vadd.f32 0.0, %v219
    %221 = vmatmul.bf16.gmra.mxu0 %v201
    %v222 = vpop.f32.mrf.mxu0
    %v223 = vadd.f32 0.0, %v222
    %v224 = vpop.f32.mrf.mxu0
    %v225 = vadd.f32 0.0, %v224
    %226 = vdwg.mxu0
    %227 = vmatpush.bf16.msra.mxu0 0
    %228 = vmatpush.bf16.msra.mxu0 0
    %229 = vmatpush.bf16.msra.mxu0 0
    %230 = vmatpush.bf16.msra.mxu0 0
    %231 = vmatpush.bf16.msra.mxu0 0
    %232 = vmatpush.bf16.msra.mxu0 0
    %233 = vmatpush.bf16.msra.mxu0 0
    %234 = vmatpush.bf16.msra.mxu0 %v206
    %235 = vmatmul.bf16.gmra.mxu0 %v198
    %v236 = vpop.f32.mrf.mxu0
    %v237 = vadd.f32 0.0, %v236
    %v238 = vpop.f32.mrf.mxu0
    %v239 = vadd.f32 0.0, %v238
    %240 = vmatmul.bf16.gmra.mxu0 %v201
    %v241 = vpop.f32.mrf.mxu0
    %v242 = vadd.f32 0.0, %v241
    %v243 = vpop.f32.mrf.mxu0
    %v244 = vadd.f32 0.0, %v243
    %245 = vdwg.mxu0
    %v278 = vunpack.c.l.b16 %v159
    %v279 = vunpack.c.h.b16 %v159
    %v280 = vunpack.c.l.b16 %v160
    %v281 = vunpack.c.h.b16 %v160
    %v282 = vunpack.c.l.b16 %v161
    %v283 = vunpack.c.h.b16 %v161
    %v284 = vunpack.c.l.b16 %v162
    %v285 = vunpack.c.h.b16 %v162
    %v286 = vunpack.c.l.b16 %v163
    %v287 = vunpack.c.h.b16 %v163
    %v288 = vunpack.c.l.b16 %v164
    %v289 = vunpack.c.h.b16 %v164
    %v290 = vunpack.c.l.b16 %v165
    %v291 = vunpack.c.h.b16 %v165
    %v292 = vunpack.c.l.b16 %v166
    %v293 = vunpack.c.h.b16 %v166
    %v294 = vunpack.c.l.b16 %v167
    %v295 = vunpack.c.h.b16 %v167
    %v296 = vunpack.c.l.b16 %v168
    %v297 = vunpack.c.h.b16 %v168
    %v298 = vunpack.c.l.b16 %v169
    %v299 = vunpack.c.h.b16 %v169
    %v300 = vunpack.c.l.b16 %v170
    %v301 = vunpack.c.h.b16 %v170
    %v302 = vunpack.c.l.b16 %v171
    %v303 = vunpack.c.h.b16 %v171
    %v304 = vunpack.c.l.b16 %v172
    %v305 = vunpack.c.h.b16 %v172
    %v306 = vunpack.c.l.b16 %v173
    %v307 = vunpack.c.h.b16 %v173
    %v308 = vunpack.c.l.b16 %v174
    %v309 = vunpack.c.h.b16 %v174
    %v310 = vunpack.c.l.b16 %v175
    %v311 = vunpack.c.h.b16 %v175
    %v312 = vunpack.c.l.b16 %v176
    %v313 = vunpack.c.h.b16 %v176
    %v314 = vunpack.c.l.b16 %v177
    %v315 = vunpack.c.h.b16 %v177
    %v316 = vunpack.c.l.b16 %v178
    %v317 = vunpack.c.h.b16 %v178
    %v318 = vunpack.c.l.b16 %v179
    %v319 = vunpack.c.h.b16 %v179
    %v320 = vunpack.c.l.b16 %v180
    %v321 = vunpack.c.h.b16 %v180
    %v322 = vunpack.c.l.b16 %v181
    %v323 = vunpack.c.h.b16 %v181
    %v324 = vunpack.c.l.b16 %v182
    %v325 = vunpack.c.h.b16 %v182
    %v326 = vunpack.c.l.b16 %v183
    %v327 = vunpack.c.h.b16 %v183
    %v328 = vunpack.c.l.b16 %v184
    %v329 = vunpack.c.h.b16 %v184
    %v330 = vunpack.c.l.b16 %v185
    %v331 = vunpack.c.h.b16 %v185
    %v332 = vunpack.c.l.b16 %v186
    %v333 = vunpack.c.h.b16 %v186
    %v334 = vunpack.c.l.b16 %v187
    %v335 = vunpack.c.h.b16 %v187
    %v336 = vunpack.c.l.b16 %v188
    %v337 = vunpack.c.h.b16 %v188
    %v338 = vunpack.c.l.b16 %v189
    %v339 = vunpack.c.h.b16 %v189
    %v340 = vunpack.c.l.b16 %v190
    %v341 = vunpack.c.h.b16 %v190
    %v342 = vpack.c.b16 %v280, %v278
    %v343 = vpack.c.b16 %v281, %v279
    %v344 = vpack.c.b16 %v284, %v282
    %v345 = vpack.c.b16 %v285, %v283
    %v346 = vpack.c.b16 %v288, %v286
    %v347 = vpack.c.b16 %v289, %v287
    %v348 = vpack.c.b16 %v292, %v290
    %v349 = vpack.c.b16 %v293, %v291
    %v350 = vpack.c.b16 %v296, %v294
    %v351 = vpack.c.b16 %v297, %v295
    %v352 = vpack.c.b16 %v300, %v298
    %v353 = vpack.c.b16 %v301, %v299
    %v354 = vpack.c.b16 %v304, %v302
    %v355 = vpack.c.b16 %v305, %v303
    %v356 = vpack.c.b16 %v308, %v306
    %v357 = vpack.c.b16 %v309, %v307
    %v358 = vpack.c.b16 %v312, %v310
    %v359 = vpack.c.b16 %v313, %v311
    %v360 = vpack.c.b16 %v316, %v314
    %v361 = vpack.c.b16 %v317, %v315
    %v362 = vpack.c.b16 %v320, %v318
    %v363 = vpack.c.b16 %v321, %v319
    %v364 = vpack.c.b16 %v324, %v322
    %v365 = vpack.c.b16 %v325, %v323
    %v366 = vpack.c.b16 %v328, %v326
    %v367 = vpack.c.b16 %v329, %v327
    %v368 = vpack.c.b16 %v332, %v330
    %v369 = vpack.c.b16 %v333, %v331
    %v370 = vpack.c.b16 %v336, %v334
    %v371 = vpack.c.b16 %v337, %v335
    %v372 = vpack.c.b16 %v340, %v338
    %v373 = vpack.c.b16 %v341, %v339
    %406 = vmatpush.bf16.msra.mxu0 %v356
    %407 = vmatpush.bf16.msra.mxu0 %v354
    %408 = vmatpush.bf16.msra.mxu0 %v352
    %409 = vmatpush.bf16.msra.mxu0 %v350
    %410 = vmatpush.bf16.msra.mxu0 %v348
    %411 = vmatpush.bf16.msra.mxu0 %v346
    %412 = vmatpush.bf16.msra.mxu0 %v344
    %413 = vmatpush.bf16.msra.mxu0 %v342
    %414 = vmatmul.bf16.gmra.mxu0 %v155
    %v415 = vpop.f32.mrf.mxu0
    %v416 = vadd.f32 %v218, %v415
    %v417 = vpop.f32.mrf.mxu0
    %v418 = vadd.f32 %v220, %v417
    %419 = vmatmul.bf16.gmra.mxu0 %v157
    %v420 = vpop.f32.mrf.mxu0
    %v421 = vadd.f32 %v223, %v420
    %v422 = vpop.f32.mrf.mxu0
    %v423 = vadd.f32 %v225, %v422
    %424 = vdwg.mxu0
    %425 = vmatpush.bf16.msra.mxu0 %v372
    %426 = vmatpush.bf16.msra.mxu0 %v370
    %427 = vmatpush.bf16.msra.mxu0 %v368
    %428 = vmatpush.bf16.msra.mxu0 %v366
    %429 = vmatpush.bf16.msra.mxu0 %v364
    %430 = vmatpush.bf16.msra.mxu0 %v362
    %431 = vmatpush.bf16.msra.mxu0 %v360
    %432 = vmatpush.bf16.msra.mxu0 %v358
    %433 = vmatmul.bf16.gmra.mxu0 %v156
    %v434 = vpop.f32.mrf.mxu0
    %v435 = vadd.f32 %v416, %v434
    %v436 = vpop.f32.mrf.mxu0
    %v437 = vadd.f32 %v418, %v436
    %438 = vmatmul.bf16.gmra.mxu0 %v158
    %v439 = vpop.f32.mrf.mxu0
    %v440 = vadd.f32 %v421, %v439
    %v441 = vpop.f32.mrf.mxu0
    %v442 = vadd.f32 %v423, %v441
    %443 = vdwg.mxu0
    %444 = vmatpush.bf16.msra.mxu0 %v357
    %445 = vmatpush.bf16.msra.mxu0 %v355
    %446 = vmatpush.bf16.msra.mxu0 %v353
    %447 = vmatpush.bf16.msra.mxu0 %v351
    %448 = vmatpush.bf16.msra.mxu0 %v349
    %449 = vmatpush.bf16.msra.mxu0 %v347
    %450 = vmatpush.bf16.msra.mxu0 %v345
    %451 = vmatpush.bf16.msra.mxu0 %v343
    %452 = vmatmul.bf16.gmra.mxu0 %v155
    %v453 = vpop.f32.mrf.mxu0
    %v454 = vadd.f32 %v237, %v453
    %v455 = vpop.f32.mrf.mxu0
    %v456 = vadd.f32 %v239, %v455
    %457 = vmatmul.bf16.gmra.mxu0 %v157
    %v458 = vpop.f32.mrf.mxu0
    %v459 = vadd.f32 %v242, %v458
    %v460 = vpop.f32.mrf.mxu0
    %v461 = vadd.f32 %v244, %v460
    %462 = vdwg.mxu0
    %463 = vmatpush.bf16.msra.mxu0 %v373
    %464 = vmatpush.bf16.msra.mxu0 %v371
    %465 = vmatpush.bf16.msra.mxu0 %v369
    %466 = vmatpush.bf16.msra.mxu0 %v367
    %467 = vmatpush.bf16.msra.mxu0 %v365
    %468 = vmatpush.bf16.msra.mxu0 %v363
    %469 = vmatpush.bf16.msra.mxu0 %v361
    %470 = vmatpush.bf16.msra.mxu0 %v359
    %471 = vmatmul.bf16.gmra.mxu0 %v156
    %v472 = vpop.f32.mrf.mxu0
    %v473 = vadd.f32 %v454, %v472
    %v474 = vpop.f32.mrf.mxu0
    %v475 = vadd.f32 %v456, %v474
    %476 = vmatmul.bf16.gmra.mxu0 %v158
    %v477 = vpop.f32.mrf.mxu0
    %v478 = vadd.f32 %v459, %v477
    %v479 = vpop.f32.mrf.mxu0
    %v480 = vadd.f32 %v461, %v479
    %481 = vdwg.mxu0
    %v482 = vld [vmem:[%s6] sm:$0x3]
    %v484 = vperm.slane %v482, 0
    %v485 = vperm.slane %v482, 1
    %v488 = vadd.f32 %v435, %v484
    %v489 = vadd.f32 %v473, %v485
    %v490 = vadd.f32 %v437, %v484
    %v491 = vadd.f32 %v475, %v485
    %v492 = vadd.f32 %v440, %v484
    %v493 = vadd.f32 %v478, %v485
    %v494 = vadd.f32 %v442, %v484
    %v495 = vadd.f32 %v480, %v485
    %v496 = vmax.f32 %v488, 0.0
    %v497 = vmax.f32 %v489, 0.0
    %v498 = vmax.f32 %v490, 0.0
    %v499 = vmax.f32 %v491, 0.0
    %v500 = vmax.f32 %v492, 0.0
    %v501 = vmax.f32 %v493, 0.0
    %v502 = vmax.f32 %v494, 0.0
    %v503 = vmax.f32 %v495, 0.0
    %v504 = vpack.c.bf16 %v498, %v496
    %v505 = vpack.c.bf16 %v499, %v497
    %v506 = vpack.c.bf16 %v502, %v500
    %v507 = vpack.c.bf16 %v503, %v501
    %v508 = vld [vmem:[#allocation5] sm:$0xff]
    %v509 = vld [vmem:[#allocation5 + $0x8] sm:$0xff]
    %v510 = vld [vmem:[#allocation5 + $0x10] sm:$0xff]
    %v511 = vld [vmem:[#allocation5 + $0x18] sm:$0xff]
    %v512 = vld [vmem:[#allocation5 + $0x20] sm:$0xff]
    %v513 = vld [vmem:[#allocation5 + $0x28] sm:$0xff]
    %v514 = vld [vmem:[#allocation5 + $0x30] sm:$0xff]
    %v515 = vld [vmem:[#allocation5 + $0x38] sm:$0xff]
    %v516 = vld [vmem:[#allocation5 + $0x40] sm:$0xff]
    %v517 = vld [vmem:[#allocation5 + $0x48] sm:$0xff]
    %v518 = vld [vmem:[#allocation5 + $0x50] sm:$0xff]
    %v519 = vld [vmem:[#allocation5 + $0x58] sm:$0xff]
    %v520 = vld [vmem:[#allocation5 + $0x60] sm:$0xff]
    %v521 = vld [vmem:[#allocation5 + $0x68] sm:$0xff]
    %v522 = vld [vmem:[#allocation5 + $0x70] sm:$0xff]
    %v523 = vld [vmem:[#allocation5 + $0x78] sm:$0xff]
    %v524 = vld [vmem:[#allocation5 + $0x80] sm:$0xff]
    %v525 = vld [vmem:[#allocation5 + $0x88] sm:$0xff]
    %v526 = vld [vmem:[#allocation5 + $0x90] sm:$0xff]
    %v527 = vld [vmem:[#allocation5 + $0x98] sm:$0xff]
    %v528 = vld [vmem:[#allocation5 + $0xa0] sm:$0xff]
    %v529 = vld [vmem:[#allocation5 + $0xa8] sm:$0xff]
    %v530 = vld [vmem:[#allocation5 + $0xb0] sm:$0xff]
    %v531 = vld [vmem:[#allocation5 + $0xb8] sm:$0xff]
    %v532 = vld [vmem:[#allocation5 + $0xc0] sm:$0xff]
    %v533 = vld [vmem:[#allocation5 + $0xc8] sm:$0xff]
    %v534 = vld [vmem:[#allocation5 + $0xd0] sm:$0xff]
    %v535 = vld [vmem:[#allocation5 + $0xd8] sm:$0xff]
    %v536 = vld [vmem:[#allocation5 + $0xe0] sm:$0xff]
    %v537 = vld [vmem:[#allocation5 + $0xe8] sm:$0xff]
    %v538 = vld [vmem:[#allocation5 + $0xf0] sm:$0xff]
    %v539 = vld [vmem:[#allocation5 + $0xf8] sm:$0xff]
    %v540 = vld [vmem:[%s8] sm:$0x3]
    %v542 = vperm.slane %v540, 0
    %v543 = vperm.slane %v540, 1
    %v578 = vunpack.c.l.b16 %v508
    %v579 = vunpack.c.h.b16 %v508
    %v580 = vunpack.c.l.b16 %v509
    %v581 = vunpack.c.h.b16 %v509
    %v582 = vunpack.c.l.b16 %v510
    %v583 = vunpack.c.h.b16 %v510
    %v584 = vunpack.c.l.b16 %v511
    %v585 = vunpack.c.h.b16 %v511
    %v586 = vunpack.c.l.b16 %v512
    %v587 = vunpack.c.h.b16 %v512
    %v588 = vunpack.c.l.b16 %v513
    %v589 = vunpack.c.h.b16 %v513
    %v590 = vunpack.c.l.b16 %v514
    %v591 = vunpack.c.h.b16 %v514
    %v592 = vunpack.c.l.b16 %v515
    %v593 = vunpack.c.h.b16 %v515
    %v594 = vunpack.c.l.b16 %v516
    %v595 = vunpack.c.h.b16 %v516
    %v596 = vunpack.c.l.b16 %v517
    %v597 = vunpack.c.h.b16 %v517
    %v598 = vunpack.c.l.b16 %v518
    %v599 = vunpack.c.h.b16 %v518
    %v600 = vunpack.c.l.b16 %v519
    %v601 = vunpack.c.h.b16 %v519
    %v602 = vunpack.c.l.b16 %v520
    %v603 = vunpack.c.h.b16 %v520
    %v604 = vunpack.c.l.b16 %v521
    %v605 = vunpack.c.h.b16 %v521
    %v606 = vunpack.c.l.b16 %v522
    %v607 = vunpack.c.h.b16 %v522
    %v608 = vunpack.c.l.b16 %v523
    %v609 = vunpack.c.h.b16 %v523
    %v610 = vunpack.c.l.b16 %v524
    %v611 = vunpack.c.h.b16 %v524
    %v612 = vunpack.c.l.b16 %v525
    %v613 = vunpack.c.h.b16 %v525
    %v614 = vunpack.c.l.b16 %v526
    %v615 = vunpack.c.h.b16 %v526
    %v616 = vunpack.c.l.b16 %v527
    %v617 = vunpack.c.h.b16 %v527
    %v618 = vunpack.c.l.b16 %v528
    %v619 = vunpack.c.h.b16 %v528
    %v620 = vunpack.c.l.b16 %v529
    %v621 = vunpack.c.h.b16 %v529
    %v622 = vunpack.c.l.b16 %v530
    %v623 = vunpack.c.h.b16 %v530
    %v624 = vunpack.c.l.b16 %v531
    %v625 = vunpack.c.h.b16 %v531
    %v626 = vunpack.c.l.b16 %v532
    %v627 = vunpack.c.h.b16 %v532
    %v628 = vunpack.c.l.b16 %v533
    %v629 = vunpack.c.h.b16 %v533
    %v630 = vunpack.c.l.b16 %v534
    %v631 = vunpack.c.h.b16 %v534
    %v632 = vunpack.c.l.b16 %v535
    %v633 = vunpack.c.h.b16 %v535
    %v634 = vunpack.c.l.b16 %v536
    %v635 = vunpack.c.h.b16 %v536
    %v636 = vunpack.c.l.b16 %v537
    %v637 = vunpack.c.h.b16 %v537
    %v638 = vunpack.c.l.b16 %v538
    %v639 = vunpack.c.h.b16 %v538
    %v640 = vunpack.c.l.b16 %v539
    %v641 = vunpack.c.h.b16 %v539
    %v642 = vpack.c.b16 %v580, %v578
    %v643 = vpack.c.b16 %v581, %v579
    %v644 = vpack.c.b16 %v584, %v582
    %v645 = vpack.c.b16 %v585, %v583
    %v646 = vpack.c.b16 %v588, %v586
    %v647 = vpack.c.b16 %v589, %v587
    %v648 = vpack.c.b16 %v592, %v590
    %v649 = vpack.c.b16 %v593, %v591
    %v650 = vpack.c.b16 %v596, %v594
    %v651 = vpack.c.b16 %v597, %v595
    %v652 = vpack.c.b16 %v600, %v598
    %v653 = vpack.c.b16 %v601, %v599
    %v654 = vpack.c.b16 %v604, %v602
    %v655 = vpack.c.b16 %v605, %v603
    %v656 = vpack.c.b16 %v608, %v606
    %v657 = vpack.c.b16 %v609, %v607
    %v658 = vpack.c.b16 %v612, %v610
    %v659 = vpack.c.b16 %v613, %v611
    %v660 = vpack.c.b16 %v616, %v614
    %v661 = vpack.c.b16 %v617, %v615
    %v662 = vpack.c.b16 %v620, %v618
    %v663 = vpack.c.b16 %v621, %v619
    %v664 = vpack.c.b16 %v624, %v622
    %v665 = vpack.c.b16 %v625, %v623
    %v666 = vpack.c.b16 %v628, %v626
    %v667 = vpack.c.b16 %v629, %v627
    %v668 = vpack.c.b16 %v632, %v630
    %v669 = vpack.c.b16 %v633, %v631
    %v670 = vpack.c.b16 %v636, %v634
    %v671 = vpack.c.b16 %v637, %v635
    %v672 = vpack.c.b16 %v640, %v638
    %v673 = vpack.c.b16 %v641, %v639
    %706 = vmatpush.bf16.msra.mxu0 %v656
    %707 = vmatpush.bf16.msra.mxu0 %v654
    %708 = vmatpush.bf16.msra.mxu0 %v652
    %709 = vmatpush.bf16.msra.mxu0 %v650
    %710 = vmatpush.bf16.msra.mxu0 %v648
    %711 = vmatpush.bf16.msra.mxu0 %v646
    %712 = vmatpush.bf16.msra.mxu0 %v644
    %713 = vmatpush.bf16.msra.mxu0 %v642
    %714 = vmatmul.bf16.gmra.mxu0 %v504
    %v715 = vpop.f32.mrf.mxu0
    %v716 = vadd.f32 %v542, %v715
    %v717 = vpop.f32.mrf.mxu0
    %v718 = vadd.f32 %v542, %v717
    %719 = vmatmul.bf16.gmra.mxu0 %v506
    %v720 = vpop.f32.mrf.mxu0
    %v721 = vadd.f32 %v542, %v720
    %v722 = vpop.f32.mrf.mxu0
    %v723 = vadd.f32 %v542, %v722
    %724 = vdwg.mxu0
    %725 = vmatpush.bf16.msra.mxu0 %v672
    %726 = vmatpush.bf16.msra.mxu0 %v670
    %727 = vmatpush.bf16.msra.mxu0 %v668
    %728 = vmatpush.bf16.msra.mxu0 %v666
    %729 = vmatpush.bf16.msra.mxu0 %v664
    %730 = vmatpush.bf16.msra.mxu0 %v662
    %731 = vmatpush.bf16.msra.mxu0 %v660
    %732 = vmatpush.bf16.msra.mxu0 %v658
    %733 = vmatmul.bf16.gmra.mxu0 %v505
    %v734 = vpop.f32.mrf.mxu0
    %v735 = vadd.f32 %v716, %v734
    %v736 = vpop.f32.mrf.mxu0
    %v737 = vadd.f32 %v718, %v736
    %738 = vmatmul.bf16.gmra.mxu0 %v507
    %v739 = vpop.f32.mrf.mxu0
    %v740 = vadd.f32 %v721, %v739
    %v741 = vpop.f32.mrf.mxu0
    %v742 = vadd.f32 %v723, %v741
    %743 = vdwg.mxu0
    %744 = vmatpush.bf16.msra.mxu0 %v657
    %745 = vmatpush.bf16.msra.mxu0 %v655
    %746 = vmatpush.bf16.msra.mxu0 %v653
    %747 = vmatpush.bf16.msra.mxu0 %v651
    %748 = vmatpush.bf16.msra.mxu0 %v649
    %749 = vmatpush.bf16.msra.mxu0 %v647
    %750 = vmatpush.bf16.msra.mxu0 %v645
    %751 = vmatpush.bf16.msra.mxu0 %v643
    %752 = vmatmul.bf16.gmra.mxu0 %v504
    %v753 = vpop.f32.mrf.mxu0
    %v754 = vadd.f32 %v543, %v753
    %v755 = vpop.f32.mrf.mxu0
    %v756 = vadd.f32 %v543, %v755
    %757 = vmatmul.bf16.gmra.mxu0 %v506
    %v758 = vpop.f32.mrf.mxu0
    %v759 = vadd.f32 %v543, %v758
    %v760 = vpop.f32.mrf.mxu0
    %v761 = vadd.f32 %v543, %v760
    %762 = vdwg.mxu0
    %763 = vmatpush.bf16.msra.mxu0 %v673
    %764 = vmatpush.bf16.msra.mxu0 %v671
    %765 = vmatpush.bf16.msra.mxu0 %v669
    %766 = vmatpush.bf16.msra.mxu0 %v667
    %767 = vmatpush.bf16.msra.mxu0 %v665
    %768 = vmatpush.bf16.msra.mxu0 %v663
    %769 = vmatpush.bf16.msra.mxu0 %v661
    %770 = vmatpush.bf16.msra.mxu0 %v659
    %771 = vmatmul.bf16.gmra.mxu0 %v505
    %v772 = vpop.f32.mrf.mxu0
    %v773 = vadd.f32 %v754, %v772
    %v774 = vpop.f32.mrf.mxu0
    %v775 = vadd.f32 %v756, %v774
    %776 = vmatmul.bf16.gmra.mxu0 %v507
    %v777 = vpop.f32.mrf.mxu0
    %v778 = vadd.f32 %v759, %v777
    %v779 = vpop.f32.mrf.mxu0
    %v780 = vadd.f32 %v761, %v779
    %781 = vdwg.mxu0
    %v782 = vmax.f32 %v735, 0.0
    %v783 = vmax.f32 %v773, 0.0
    %v784 = vmax.f32 %v737, 0.0
    %v785 = vmax.f32 %v775, 0.0
    %v786 = vmax.f32 %v740, 0.0
    %v787 = vmax.f32 %v778, 0.0
    %v788 = vmax.f32 %v742, 0.0
    %v789 = vmax.f32 %v780, 0.0
    %v790 = vld [vmem:[%s9] sm:$0x3]
    %v792 = vperm.slane %v790, 0
    %v793 = vperm.slane %v790, 1
    %v796 = vmul.f32 %v782, %v792
    %v797 = vmul.f32 %v783, %v793
    %v798 = vmul.f32 %v784, %v792
    %v799 = vmul.f32 %v785, %v793
    %v800 = vmul.f32 %v786, %v792
    %v801 = vmul.f32 %v787, %v793
    %v802 = vmul.f32 %v788, %v792
    %v803 = vmul.f32 %v789, %v793
    %v804 = vadd.f32 %v796, %v797
    %805 = vadd.xlane.f32.xlu0 %v804
    %v806 = vpop.xlane.xlu0 %805
    %v807 = vadd.f32 %v798, %v799
    %808 = vadd.xlane.f32.xlu0 %v807
    %v809 = vpop.xlane.xlu0 %808
    %v810 = vadd.f32 %v800, %v801
    %811 = vadd.xlane.f32.xlu0 %v810
    %v812 = vpop.xlane.xlu0 %811
    %v813 = vadd.f32 %v802, %v803
    %814 = vadd.xlane.f32.xlu0 %v813
    %v815 = vpop.xlane.xlu0 %814
    %s816 = sld [smem:[#allocation2]]
    %v817 = vstv %s816
    %v818 = vadd.f32 %v806, %v817
    %v819 = vadd.f32 %v809, %v817
    %v820 = vadd.f32 %v812, %v817
    %v821 = vadd.f32 %v815, %v817
    %vm822 = vcmask 7168
    %823 = vst.msk [vmem:[%s11] sm:$0xff] %vm822, %v818
    %824 = vst.msk [vmem:[%s11 + $0x8] sm:$0xff] %vm822, %v819
    %825 = vst.msk [vmem:[%s11 + $0x10] sm:$0xff] %vm822, %v820
    %826 = vst.msk [vmem:[%s11 + $0x18] sm:$0xff] %vm822, %v821
    // Predicated region
    $region54: #{tpu_custom_call.1} parent=1 // pred_check
      _
    $region55: #{tpu_custom_call.1} parent=1 // pred_check_branch
      %828 = sbr.rel (0) target = $region57
    $region56: #{tpu_custom_call.1} parent=1 // pred_region
      _
    $region57: #{tpu_custom_call.1} parent=1 // pred_fallthru
      _
    // Predicated region
    $region58: #{tpu_custom_call.1} parent=1 // pred_check
      _
    $region59: #{tpu_custom_call.1} parent=1 // pred_check_branch
      %830 = sbr.rel (0) target = $region61
    $region60: #{tpu_custom_call.1} parent=1 // pred_region
      _
    $region61: #{tpu_custom_call.1} parent=1 // pred_fallthru
      _
    %831 = vsyncpa [#allocation4], 1
    %832 = vsyncpa [#allocation6], 1

</llo_original>
